<compile_context>
chip_gen: v5e
topology: v5e:2x2
jax: 0.10.0
libtpu: 0.0.40
codegen_flags: <defaults>
</compile_context>

<pallas_src>
import functools

import jax
import jax.numpy as jnp
from jax import lax
from jax.experimental import pallas as pl
from jax.experimental.pallas import tpu as pltpu


# ----------------------------- Pallas kernel ------------------------------- #
def _self_attention_kernel(zx_ref, zkv_ref, zres_ref, wpack_ref, bo_ref,
                           gamma_ref, out_ref, q_scr, k_scr, v_scr,
                           *, Bt, P, C, Ck, Cv, matmul_dtype):
    QP = 4 * P                         # query pixels per image (= H*W)
    R = Bt * P                         # pooled rows in this batch tile
    Ckv = Ck + Cv
    gamma = gamma_ref[0, 0]

    # Fused weight block (single DMA per grid step); load whole 8-aligned row
    # bands, slice the values (value slices are cheap, once per tile).
    w_in = wpack_ref[0:C, :]                        # [wq | wk | wv]
    b_in = wpack_ref[C:C + 1, :]                    # [bq | bk | bv]
    wo = wpack_ref[C + 8:C + 8 + Cv, :][:, 0:C]     # (Cv, C)
    wq, wkv = w_in[:, 0:Ck], w_in[:, Ck:Ck + Ckv]
    bq, bkv = b_in[:, 0:Ck], b_in[:, Ck:Ck + Ckv]

    # Query projection for every pixel of the tile: one MXU matmul.
    q_all = jnp.dot(zx_ref[...], wq, preferred_element_type=jnp.float32) + bq
    q_scr[...] = q_all.astype(matmul_dtype)

    # Fused Key|Value projection, then MaxPool2d(2,2) as three elementwise
    # maxima over the four contiguous corner slabs (bias added post-pool).
    kv = jnp.dot(zkv_ref[...], wkv, preferred_element_type=jnp.float32)  # (4R, Ckv)
    kv = jnp.maximum(jnp.maximum(kv[0 * R:1 * R], kv[1 * R:2 * R]),
                     jnp.maximum(kv[2 * R:3 * R], kv[3 * R:4 * R])) + bkv  # (R, Ckv)
    k_scr[...] = kv[:, 0:Ck].astype(matmul_dtype)
    v_scr[...] = kv[:, Ck:Ckv].astype(matmul_dtype)

    # Residual bias (gamma * bo, lane-tiled) hoisted out of the image loop.
    res_bias = jnp.broadcast_to(gamma * bo_ref[...], (P, 4 * C))

    def body(bt, carry):
        r0 = pl.multiple_of(bt * QP, QP)
        p0 = pl.multiple_of(bt * P, P)
        q_img = q_scr[pl.ds(r0, QP), :]              # (4P, Ck)
        kp = k_scr[pl.ds(p0, P), :]                  # (P, Ck)
        vp = v_scr[pl.ds(p0, P), :]                  # (P, Cv)

        # All four window corners attended in one fused block per image.
        logits = lax.dot_general(q_img, kp, (((1,), (1,)), ((), ())),
                                 preferred_element_type=jnp.float32)     # (4P, P)
        m = jnp.max(logits, axis=-1, keepdims=True)
        e = jnp.exp(logits - m)
        s = jnp.sum(e, axis=-1, keepdims=True)
        av = jnp.dot(e.astype(matmul_dtype), vp,
                     preferred_element_type=jnp.float32)                 # (4P, Cv)
        av = av * pl.reciprocal(s, approx=True)      # normalize after PV matmul
        o = jnp.dot(av.astype(matmul_dtype), wo,
                    preferred_element_type=jnp.float32)                  # (4P, C)

        # Single sublane->lane repack per image: corner row-blocks -> lane
        # chunks, then one full-width (128-lane) residual store.
        o_lane = jnp.concatenate([o[q * P:(q + 1) * P] for q in range(4)],
                                 axis=-1)                                # (P, 4C)
        out_ref[pl.ds(p0, P), :] = (gamma * o_lane + res_bias
                                    + zres_ref[pl.ds(p0, P), :])
        return carry

    lax.fori_loop(0, Bt, body, None,
                  unroll=2 if (Bt > 1 and Bt % 2 == 0) else 1)


# ------------------------------ layout glue --------------------------------- #
def _pack_corner_major(x, group):
    """NCHW -> (b*4P, C).  Row order: image-group, corner q=2*di+dj, image in
    group, pooled window p.  group=1 gives the query layout (corner-major per
    image); group=Bt gives the K/V layout (corner-major per batch tile), so
    MaxPool2d(2,2) is 3 elementwise maxima over contiguous row chunks."""
    b, c, h, w = x.shape
    hp, wp = h // 2, w // 2
    ng = b // group
    x = x.reshape(ng, group, c, hp, 2, wp, 2)
    x = jnp.transpose(x, (0, 4, 6, 1, 3, 5, 2))     # (ng, di, dj, group, hp, wp, c)
    return x.reshape(b * 4 * hp * wp, c)


def _pack_lane(x):
    """NCHW -> (b*P, 4*C): row = (image, window), lane = corner*C + channel."""
    b, c, h, w = x.shape
    hp, wp = h // 2, w // 2
    x = x.reshape(b, c, hp, 2, wp, 2)
    x = jnp.transpose(x, (0, 2, 4, 3, 5, 1))        # (b, hp, wp, di, dj, c)
    return x.reshape(b * hp * wp, 4 * c)


def _unpack_lane(y, b, c, h, w):
    """Inverse of _pack_lane, back to NCHW."""
    hp, wp = h // 2, w // 2
    y = y.reshape(b, hp, wp, 2, 2, c)
    y = jnp.transpose(y, (0, 5, 1, 3, 2, 4))        # (b, c, hp, di, wp, dj)
    return y.reshape(b, c, h, w)


def _choose_batch_tile(b, P, target_rows=2048):
    """Largest image count per grid step with <= target_rows pooled windows.
    No '>=2 grid steps' rule: v5e/v6e are single-TensorCore, the grid is a
    serial loop, so bigger tiles just amortize per-step overhead."""
    if P % 8 != 0:
        # Keep every BlockSpec dim equal to the full array (always legal) and
        # every dynamic row slice starting at 0-per-image alignment handled.
        return b
    cands = [bt for bt in range(1, b + 1) if b % bt == 0 and bt * P <= target_rows]
    return max(cands) if cands else 1


# ------------------------------- wrapper ------------------------------------ #
def self_attention_pallas(zx, z, params, K=8, matmul_dtype=jnp.float32,
                          target_rows=2048):
    b, c, h, w = zx.shape
    assert zx.shape == z.shape
    assert h % 2 == 0 and w % 2 == 0, "MaxPool2d(2,2) needs even spatial dims"
    ck, cv = c // K, c // 2
    ckv = ck + cv
    P = (h // 2) * (w // 2)
    QP = 4 * P                                      # pixels per image (= h*w)

    Bt = _choose_batch_tile(b, P, target_rows)
    grid = (b // Bt,)

    # Wrapper-side packing (fuses into the surrounding XLA transposes).
    zx_q = _pack_corner_major(zx, 1).astype(matmul_dtype)       # (b*QP, C)
    z_kv = _pack_corner_major(z, Bt).astype(matmul_dtype)       # (b*QP, C)
    z_res = _pack_lane(z).astype(jnp.float32)                   # (b*P, 4C)

    # Fused weight/bias block: [wq|wk|wv ; bq|bk|bv ; wo] -> one DMA per step.
    wrows, wcols = c + 8 + cv, max(c, ck + ckv)
    wpack = jnp.zeros((wrows, wcols), matmul_dtype)
    wpack = wpack.at[:c, :ck].set(params["wq"].astype(matmul_dtype))
    wpack = wpack.at[:c, ck:ck + ckv].set(
        jnp.concatenate([params["wk"], params["wv"]], axis=1).astype(matmul_dtype))
    wpack = wpack.at[c, :ck].set(params["bq"][0].astype(matmul_dtype))
    wpack = wpack.at[c, ck:ck + ckv].set(
        jnp.concatenate([params["bk"], params["bv"]], axis=1)[0].astype(matmul_dtype))
    wpack = wpack.at[c + 8:c + 8 + cv, :c].set(params["wo"].astype(matmul_dtype))

    bo_lane = jnp.tile(params["bo"].astype(jnp.float32), (1, 4))    # (1, 4C)
    gamma2d = params["gamma"].reshape(1, 1).astype(jnp.float32)

    kern = functools.partial(_self_attention_kernel, Bt=Bt, P=P, C=c,
                             Ck=ck, Cv=cv, matmul_dtype=matmul_dtype)

    def full(shape):
        return pl.BlockSpec(shape, lambda i, _n=len(shape): (0,) * _n)

    out_p = pl.pallas_call(
        kern,
        out_shape=jax.ShapeDtypeStruct((b * P, 4 * c), jnp.float32),
        grid_spec=pltpu.PrefetchScalarGridSpec(
            num_scalar_prefetch=0,
            grid=grid,
            in_specs=[
                pl.BlockSpec((Bt * QP, c), lambda i: (i, 0)),        # zx (queries)
                pl.BlockSpec((Bt * QP, c), lambda i: (i, 0)),        # z  (key/val)
                pl.BlockSpec((Bt * P, 4 * c), lambda i: (i, 0)),     # z  (residual)
                full((wrows, wcols)),                                # fused weights
                full((1, 4 * c)),                                    # bo (lane-tiled)
                pl.BlockSpec(memory_space=pltpu.MemorySpace.SMEM),   # gamma
            ],
            out_specs=pl.BlockSpec((Bt * P, 4 * c), lambda i: (i, 0)),
            scratch_shapes=[
                pltpu.VMEM((Bt * QP, ck), matmul_dtype),    # queries
                pltpu.VMEM((Bt * P, ck), matmul_dtype),     # pooled keys
                pltpu.VMEM((Bt * P, cv), matmul_dtype),     # pooled values
            ],
        ),
        compiler_params=pltpu.CompilerParams(
            dimension_semantics=("parallel",)),
    )(zx_q, z_kv, z_res, wpack, bo_lane, gamma2d)

    out = _unpack_lane(out_p, b, c, h, w)               # back to NCHW
    return out, params["gamma"]


# -------------------------- deterministic params ---------------------------- #
def init_params(key, in_channel=32, K=8):
    # Conv2d(cin, cout, 1x1) weight (cout, cin, 1, 1) is stored directly as the
    # (cin, cout) matmul matrix; bias as (1, cout).  gamma = zeros(1) as in the
    # PyTorch module's __init__.
    ck, cv = in_channel // K, in_channel // 2
    ks = jax.random.split(key, 8)

    def wmat(k, cin, cout):
        return jax.random.normal(k, (cin, cout), jnp.float32) / jnp.sqrt(cin)

    def bvec(k, cout):
        return jax.random.normal(k, (1, cout), jnp.float32) * 0.01

    return dict(
        wq=wmat(ks[0], in_channel, ck), bq=bvec(ks[1], ck),
        wk=wmat(ks[2], in_channel, ck), bk=bvec(ks[3], ck),
        wv=wmat(ks[4], in_channel, cv), bv=bvec(ks[5], cv),
        wo=wmat(ks[6], cv, in_channel), bo=bvec(ks[7], in_channel),
        gamma=jnp.zeros((1,), jnp.float32),
    )


# --------------------------- pure-JAX reference ----------------------------- #
def self_attention_ref(zx, z, params, K=8):
    b, c, h, w = zx.shape
    ck, cv = c // K, c // 2

    def conv1x1(x, wm, bias):  # x: NCHW, wm: (cin, cout)
        return jnp.einsum("bchw,cd->bdhw", x, wm) + bias.reshape(1, -1, 1, 1)

    def maxpool2(x):  # NCHW, 2x2 stride 2
        bb, cc, hh, ww = x.shape
        return jnp.max(x.reshape(bb, cc, hh // 2, 2, ww // 2, 2), axis=(3, 5))

    qr = conv1x1(zx, params["wq"], params["bq"]).reshape(b, ck, h * w)
    key = maxpool2(conv1x1(z, params["wk"], params["bk"])).reshape(b, ck, -1)
    attn = jnp.einsum("bcs,bcp->bsp", qr, key)
    attn = jax.nn.softmax(attn, axis=-1)
    val = maxpool2(conv1x1(z, params["wv"], params["bv"])).reshape(b, cv, -1)
    att_val = jnp.einsum("bsp,bcp->bcs", attn, val).reshape(b, cv, h, w)
    out = conv1x1(att_val, params["wo"], params["bo"])
    gamma = params["gamma"]
    return gamma.reshape(()) * out + z, gamma


# --------------------------------- main -------------------------------------- #
if __name__ == "__main__":
    b, c, h, w = 2, 32, 8, 8           # in_channel=32, K=8 -> Ck=4, Cv=16, P=16
    key = jax.random.PRNGKey(0)
    kp_, kx_, kz_ = jax.random.split(key, 3)

    params = init_params(kp_, in_channel=c, K=8)
    zx = jax.random.normal(kx_, (b, c, h, w), jnp.float32)
    z = jax.random.normal(kz_, (b, c, h, w), jnp.float32)

    # gamma == 0 (faithful to the module's init): output must equal z.
    out0, _ = self_attention_pallas(zx, z, params)
    out0 = jax.block_until_ready(out0)
    ref0, _ = self_attention_ref(zx, z, params)
    assert jnp.allclose(out0, ref0, rtol=1e-4, atol=1e-4)

    # Non-zero gamma so the attention branch actually contributes (f32 MXU path).
    params_nz = dict(params, gamma=jnp.full((1,), 0.5, jnp.float32))
    out_nz, _ = self_attention_pallas(zx, z, params_nz)
    out_nz = jax.block_until_ready(out_nz)
    ref_nz, _ = self_attention_ref(zx, z, params_nz)
    assert jnp.allclose(out_nz, ref_nz, rtol=1e-1, atol=1e-2)

    # bf16 MXU operands (v6e/v7x recommendation); softmax/residual stay f32.
    out_bf, _ = self_attention_pallas(zx, z, params_nz, matmul_dtype=jnp.bfloat16)
    out_bf = jax.block_until_ready(out_bf)
    assert jnp.allclose(out_bf, ref_nz, rtol=1e-1, atol=1e-1)

    print("KERNEL_OK")
</pallas_src>

<mosaic_0001>
module attributes {stable_mosaic.version = 11 : i64} {
  func.func @_self_attention_kernel(%arg0: i32, %arg1: memref<128x32xf32, #tpu.memory_space<vmem>>, %arg2: memref<128x32xf32, #tpu.memory_space<vmem>>, %arg3: memref<32x128xf32, #tpu.memory_space<vmem>>, %arg4: memref<56x32xf32, #tpu.memory_space<vmem>>, %arg5: memref<1x128xf32, #tpu.memory_space<vmem>>, %arg6: memref<1x1xf32, #tpu.memory_space<smem>>, %arg7: memref<32x128xf32, #tpu.memory_space<vmem>>, %arg8: memref<128x4xf32, #tpu.memory_space<vmem>>, %arg9: memref<32x4xf32, #tpu.memory_space<vmem>>, %arg10: memref<32x16xf32, #tpu.memory_space<vmem>>) attributes {dimension_semantics = [#tpu.dimension_semantics<parallel>], iteration_bounds = array<i64: 1>, scalar_prefetch = 0 : i64, scratch_operands = 3 : i64, tpu.core_type = #tpu.core_type<tc>, window_params = [{transform_indices = @transform_0, window_bounds = array<i64: 128, 32>}, {transform_indices = @transform_1, window_bounds = array<i64: 128, 32>}, {transform_indices = @transform_2, window_bounds = array<i64: 32, 128>}, {pipeline_mode = #tpu.pipeline_mode<synchronous>, transform_indices = @transform_3, window_bounds = array<i64: 56, 32>}, {pipeline_mode = #tpu.pipeline_mode<synchronous>, transform_indices = @transform_4, window_bounds = array<i64: 1, 128>}, {transform_indices = @transform_5, window_bounds = array<i64: 1, 1>}, {transform_indices = @transform_6, window_bounds = array<i64: 32, 128>}]} {
    %c0 = arith.constant 0 : index
    %c0_0 = arith.constant 0 : index
    %0 = memref.load %arg6[%c0, %c0_0] : memref<1x1xf32, #tpu.memory_space<smem>>
    %c0_1 = arith.constant 0 : index
    %c0_2 = arith.constant 0 : index
    %1 = vector.load %arg4[%c0_1, %c0_2] : memref<56x32xf32, #tpu.memory_space<vmem>>, vector<32x32xf32>
    %c32 = arith.constant 32 : index
    %c0_3 = arith.constant 0 : index
    %2 = vector.load %arg4[%c32, %c0_3] : memref<56x32xf32, #tpu.memory_space<vmem>>, vector<1x32xf32>
    %c40 = arith.constant 40 : index
    %c0_4 = arith.constant 0 : index
    %3 = vector.load %arg4[%c40, %c0_4] : memref<56x32xf32, #tpu.memory_space<vmem>>, vector<16x32xf32>
    %4 = vector.extract_strided_slice %1 {offsets = [0, 0], sizes = [32, 4], strides = [1, 1]} : vector<32x32xf32> to vector<32x4xf32>
    %5 = vector.extract_strided_slice %1 {offsets = [0, 4], sizes = [32, 20], strides = [1, 1]} : vector<32x32xf32> to vector<32x20xf32>
    %6 = vector.extract_strided_slice %2 {offsets = [0, 0], sizes = [1, 4], strides = [1, 1]} : vector<1x32xf32> to vector<1x4xf32>
    %7 = vector.extract_strided_slice %2 {offsets = [0, 4], sizes = [1, 20], strides = [1, 1]} : vector<1x32xf32> to vector<1x20xf32>
    %c0_5 = arith.constant 0 : index
    %c0_6 = arith.constant 0 : index
    %8 = vector.load %arg1[%c0_5, %c0_6] : memref<128x32xf32, #tpu.memory_space<vmem>>, vector<128x32xf32>
    %cst = arith.constant dense<0.000000e+00> : vector<128x4xf32>
    %9 = tpu.matmul %8, %4, %cst {dimension_numbers = #tpu.dot_dimension_numbers<[1], [0], [0], [1], [0, 0, 1, 1], [], []>} : vector<128x32xf32>, vector<32x4xf32>, vector<128x4xf32> -> vector<128x4xf32>
    %10 = vector.broadcast %6 : vector<1x4xf32> to vector<128x4xf32>
    %11 = arith.addf %9, %10 : vector<128x4xf32>
    %c0_7 = arith.constant 0 : index
    %c0_8 = arith.constant 0 : index
    %12 = vector.load %arg8[%c0_7, %c0_8] : memref<128x4xf32, #tpu.memory_space<vmem>>, vector<128x4xf32>
    tpu.vector_store %arg8[%c0_7, %c0_8], %11 {strides = array<i32>} : memref<128x4xf32, #tpu.memory_space<vmem>>, vector<128x4xf32>,
    %c0_9 = arith.constant 0 : index
    %c0_10 = arith.constant 0 : index
    %13 = vector.load %arg2[%c0_9, %c0_10] : memref<128x32xf32, #tpu.memory_space<vmem>>, vector<128x32xf32>
    %cst_11 = arith.constant dense<0.000000e+00> : vector<128x20xf32>
    %14 = tpu.matmul %13, %5, %cst_11 {dimension_numbers = #tpu.dot_dimension_numbers<[1], [0], [0], [1], [0, 0, 1, 1], [], []>} : vector<128x32xf32>, vector<32x20xf32>, vector<128x20xf32> -> vector<128x20xf32>
    %15 = vector.extract_strided_slice %14 {offsets = [0, 0], sizes = [32, 20], strides = [1, 1]} : vector<128x20xf32> to vector<32x20xf32>
    %16 = vector.extract_strided_slice %14 {offsets = [32, 0], sizes = [32, 20], strides = [1, 1]} : vector<128x20xf32> to vector<32x20xf32>
    %17 = arith.maximumf %15, %16 : vector<32x20xf32>
    %18 = vector.extract_strided_slice %14 {offsets = [64, 0], sizes = [32, 20], strides = [1, 1]} : vector<128x20xf32> to vector<32x20xf32>
    %19 = vector.extract_strided_slice %14 {offsets = [96, 0], sizes = [32, 20], strides = [1, 1]} : vector<128x20xf32> to vector<32x20xf32>
    %20 = arith.maximumf %18, %19 : vector<32x20xf32>
    %21 = arith.maximumf %17, %20 : vector<32x20xf32>
    %22 = vector.broadcast %7 : vector<1x20xf32> to vector<32x20xf32>
    %23 = arith.addf %21, %22 : vector<32x20xf32>
    %24 = vector.extract_strided_slice %23 {offsets = [0, 0], sizes = [32, 4], strides = [1, 1]} : vector<32x20xf32> to vector<32x4xf32>
    %c0_12 = arith.constant 0 : index
    %c0_13 = arith.constant 0 : index
    %25 = vector.load %arg9[%c0_12, %c0_13] : memref<32x4xf32, #tpu.memory_space<vmem>>, vector<32x4xf32>
    tpu.vector_store %arg9[%c0_12, %c0_13], %24 {strides = array<i32>} : memref<32x4xf32, #tpu.memory_space<vmem>>, vector<32x4xf32>,
    %26 = vector.extract_strided_slice %23 {offsets = [0, 4], sizes = [32, 16], strides = [1, 1]} : vector<32x20xf32> to vector<32x16xf32>
    %c0_14 = arith.constant 0 : index
    %c0_15 = arith.constant 0 : index
    %27 = vector.load %arg10[%c0_14, %c0_15] : memref<32x16xf32, #tpu.memory_space<vmem>>, vector<32x16xf32>
    tpu.vector_store %arg10[%c0_14, %c0_15], %26 {strides = array<i32>} : memref<32x16xf32, #tpu.memory_space<vmem>>, vector<32x16xf32>,
    %c0_16 = arith.constant 0 : index
    %c0_17 = arith.constant 0 : index
    %28 = vector.load %arg5[%c0_16, %c0_17] : memref<1x128xf32, #tpu.memory_space<vmem>>, vector<1x128xf32>
    %29 = vector.broadcast %0 : f32 to vector<1x128xf32>
    %30 = arith.mulf %29, %28 : vector<1x128xf32>
    %31 = vector.shape_cast %30 : vector<1x128xf32> to vector<1x128xf32>
    %32 = vector.broadcast %31 : vector<1x128xf32> to vector<16x128xf32>
    %c0_i32 = arith.constant 0 : i32
    %c64_i32 = arith.constant 64 : i32
    %33 = arith.muli %c0_i32, %c64_i32 : i32
    %34 = tpu.assume_multiple %33, 64 : i32
    %c16_i32 = arith.constant 16 : i32
    %35 = arith.muli %c0_i32, %c16_i32 : i32
    %36 = tpu.assume_multiple %35, 16 : i32
    %37 = arith.index_cast %34 : i32 to index
    %c0_18 = arith.constant 0 : index
    %38 = vector.load %arg8[%37, %c0_18] : memref<128x4xf32, #tpu.memory_space<vmem>>, vector<64x4xf32>
    %39 = arith.index_cast %36 : i32 to index
    %c0_19 = arith.constant 0 : index
    %40 = vector.load %arg9[%39, %c0_19] : memref<32x4xf32, #tpu.memory_space<vmem>>, vector<16x4xf32>
    %41 = arith.index_cast %36 : i32 to index
    %c0_20 = arith.constant 0 : index
    %42 = vector.load %arg10[%41, %c0_20] : memref<32x16xf32, #tpu.memory_space<vmem>>, vector<16x16xf32>
    %cst_21 = arith.constant dense<0.000000e+00> : vector<64x16xf32>
    %43 = tpu.matmul %38, %40, %cst_21 {dimension_numbers = #tpu.dot_dimension_numbers<[1], [1], [0], [0], [0, 0, 1, 0], [], []>} : vector<64x4xf32>, vector<16x4xf32>, vector<64x16xf32> -> vector<64x16xf32>
    %cst_22 = arith.constant dense<0xFF800000> : vector<64xf32>
    %44 = vector.multi_reduction <maximumf>, %43, %cst_22 [1] : vector<64x16xf32> to vector<64xf32>
    %45 = vector.shape_cast %44 : vector<64xf32> to vector<64x1xf32>
    %46 = vector.broadcast %45 : vector<64x1xf32> to vector<64x16xf32>
    %47 = arith.subf %43, %46 : vector<64x16xf32>
    %48 = math.exp %47 : vector<64x16xf32>
    %cst_23 = arith.constant dense<0.000000e+00> : vector<64xf32>
    %49 = vector.multi_reduction <add>, %48, %cst_23 [1] : vector<64x16xf32> to vector<64xf32>
    %50 = vector.shape_cast %49 : vector<64xf32> to vector<64x1xf32>
    %cst_24 = arith.constant dense<0.000000e+00> : vector<64x16xf32>
    %51 = tpu.matmul %48, %42, %cst_24 {dimension_numbers = #tpu.dot_dimension_numbers<[1], [0], [0], [1], [0, 0, 1, 1], [], []>} : vector<64x16xf32>, vector<16x16xf32>, vector<64x16xf32> -> vector<64x16xf32>
    %52 = tpu.reciprocal %50 {approx = true} : vector<64x1xf32> -> vector<64x1xf32>
    %53 = vector.broadcast %52 : vector<64x1xf32> to vector<64x16xf32>
    %54 = arith.mulf %51, %53 : vector<64x16xf32>
    %cst_25 = arith.constant dense<0.000000e+00> : vector<64x32xf32>
    %55 = tpu.matmul %54, %3, %cst_25 {dimension_numbers = #tpu.dot_dimension_numbers<[1], [0], [0], [1], [0, 0, 1, 1], [], []>} : vector<64x16xf32>, vector<16x32xf32>, vector<64x32xf32> -> vector<64x32xf32>
    %56 = vector.extract_strided_slice %55 {offsets = [0, 0], sizes = [16, 32], strides = [1, 1]} : vector<64x32xf32> to vector<16x32xf32>
    %57 = vector.extract_strided_slice %55 {offsets = [16, 0], sizes = [16, 32], strides = [1, 1]} : vector<64x32xf32> to vector<16x32xf32>
    %58 = vector.extract_strided_slice %55 {offsets = [32, 0], sizes = [16, 32], strides = [1, 1]} : vector<64x32xf32> to vector<16x32xf32>
    %59 = vector.extract_strided_slice %55 {offsets = [48, 0], sizes = [16, 32], strides = [1, 1]} : vector<64x32xf32> to vector<16x32xf32>
    %60 = tpu.concatenate %56, %57, %58, %59 in 1 : vector<16x32xf32>, vector<16x32xf32>, vector<16x32xf32>, vector<16x32xf32> -> vector<16x128xf32>
    %61 = vector.broadcast %0 : f32 to vector<16x128xf32>
    %62 = arith.mulf %61, %60 : vector<16x128xf32>
    %63 = arith.addf %62, %32 : vector<16x128xf32>
    %64 = arith.index_cast %36 : i32 to index
    %c0_26 = arith.constant 0 : index
    %65 = vector.load %arg3[%64, %c0_26] : memref<32x128xf32, #tpu.memory_space<vmem>>, vector<16x128xf32>
    %66 = arith.addf %63, %65 : vector<16x128xf32>
    %67 = arith.index_cast %36 : i32 to index
    %c0_27 = arith.constant 0 : index
    %68 = vector.load %arg7[%67, %c0_27] : memref<32x128xf32, #tpu.memory_space<vmem>>, vector<16x128xf32>
    tpu.vector_store %arg7[%67, %c0_27], %66 {strides = array<i32>} : memref<32x128xf32, #tpu.memory_space<vmem>>, vector<16x128xf32>,
    %c1_i32 = arith.constant 1 : i32
    %c64_i32_28 = arith.constant 64 : i32
    %69 = arith.muli %c1_i32, %c64_i32_28 : i32
    %70 = tpu.assume_multiple %69, 64 : i32
    %c16_i32_29 = arith.constant 16 : i32
    %71 = arith.muli %c1_i32, %c16_i32_29 : i32
    %72 = tpu.assume_multiple %71, 16 : i32
    %73 = arith.index_cast %70 : i32 to index
    %c0_30 = arith.constant 0 : index
    %74 = vector.load %arg8[%73, %c0_30] : memref<128x4xf32, #tpu.memory_space<vmem>>, vector<64x4xf32>
    %75 = arith.index_cast %72 : i32 to index
    %c0_31 = arith.constant 0 : index
    %76 = vector.load %arg9[%75, %c0_31] : memref<32x4xf32, #tpu.memory_space<vmem>>, vector<16x4xf32>
    %77 = arith.index_cast %72 : i32 to index
    %c0_32 = arith.constant 0 : index
    %78 = vector.load %arg10[%77, %c0_32] : memref<32x16xf32, #tpu.memory_space<vmem>>, vector<16x16xf32>
    %cst_33 = arith.constant dense<0.000000e+00> : vector<64x16xf32>
    %79 = tpu.matmul %74, %76, %cst_33 {dimension_numbers = #tpu.dot_dimension_numbers<[1], [1], [0], [0], [0, 0, 1, 0], [], []>} : vector<64x4xf32>, vector<16x4xf32>, vector<64x16xf32> -> vector<64x16xf32>
    %cst_34 = arith.constant dense<0xFF800000> : vector<64xf32>
    %80 = vector.multi_reduction <maximumf>, %79, %cst_34 [1] : vector<64x16xf32> to vector<64xf32>
    %81 = vector.shape_cast %80 : vector<64xf32> to vector<64x1xf32>
    %82 = vector.broadcast %81 : vector<64x1xf32> to vector<64x16xf32>
    %83 = arith.subf %79, %82 : vector<64x16xf32>
    %84 = math.exp %83 : vector<64x16xf32>
    %cst_35 = arith.constant dense<0.000000e+00> : vector<64xf32>
    %85 = vector.multi_reduction <add>, %84, %cst_35 [1] : vector<64x16xf32> to vector<64xf32>
    %86 = vector.shape_cast %85 : vector<64xf32> to vector<64x1xf32>
    %cst_36 = arith.constant dense<0.000000e+00> : vector<64x16xf32>
    %87 = tpu.matmul %84, %78, %cst_36 {dimension_numbers = #tpu.dot_dimension_numbers<[1], [0], [0], [1], [0, 0, 1, 1], [], []>} : vector<64x16xf32>, vector<16x16xf32>, vector<64x16xf32> -> vector<64x16xf32>
    %88 = tpu.reciprocal %86 {approx = true} : vector<64x1xf32> -> vector<64x1xf32>
    %89 = vector.broadcast %88 : vector<64x1xf32> to vector<64x16xf32>
    %90 = arith.mulf %87, %89 : vector<64x16xf32>
    %cst_37 = arith.constant dense<0.000000e+00> : vector<64x32xf32>
    %91 = tpu.matmul %90, %3, %cst_37 {dimension_numbers = #tpu.dot_dimension_numbers<[1], [0], [0], [1], [0, 0, 1, 1], [], []>} : vector<64x16xf32>, vector<16x32xf32>, vector<64x32xf32> -> vector<64x32xf32>
    %92 = vector.extract_strided_slice %91 {offsets = [0, 0], sizes = [16, 32], strides = [1, 1]} : vector<64x32xf32> to vector<16x32xf32>
    %93 = vector.extract_strided_slice %91 {offsets = [16, 0], sizes = [16, 32], strides = [1, 1]} : vector<64x32xf32> to vector<16x32xf32>
    %94 = vector.extract_strided_slice %91 {offsets = [32, 0], sizes = [16, 32], strides = [1, 1]} : vector<64x32xf32> to vector<16x32xf32>
    %95 = vector.extract_strided_slice %91 {offsets = [48, 0], sizes = [16, 32], strides = [1, 1]} : vector<64x32xf32> to vector<16x32xf32>
    %96 = tpu.concatenate %92, %93, %94, %95 in 1 : vector<16x32xf32>, vector<16x32xf32>, vector<16x32xf32>, vector<16x32xf32> -> vector<16x128xf32>
    %97 = vector.broadcast %0 : f32 to vector<16x128xf32>
    %98 = arith.mulf %97, %96 : vector<16x128xf32>
    %99 = arith.addf %98, %32 : vector<16x128xf32>
    %100 = arith.index_cast %72 : i32 to index
    %c0_38 = arith.constant 0 : index
    %101 = vector.load %arg3[%100, %c0_38] : memref<32x128xf32, #tpu.memory_space<vmem>>, vector<16x128xf32>
    %102 = arith.addf %99, %101 : vector<16x128xf32>
    %103 = arith.index_cast %72 : i32 to index
    %c0_39 = arith.constant 0 : index
    %104 = vector.load %arg7[%103, %c0_39] : memref<32x128xf32, #tpu.memory_space<vmem>>, vector<16x128xf32>
    tpu.vector_store %arg7[%103, %c0_39], %102 {strides = array<i32>} : memref<32x128xf32, #tpu.memory_space<vmem>>, vector<16x128xf32>,
    %c2_i32 = arith.constant 2 : i32
    return
  }
  func.func @transform_0(%arg0: i32) -> (i32, i32) {
    %c0_i32 = arith.constant 0 : i32
    %c0_i32_0 = arith.constant 0 : i32
    return %arg0, %c0_i32 : i32, i32
  }
  func.func @transform_1(%arg0: i32) -> (i32, i32) {
    %c0_i32 = arith.constant 0 : i32
    %c0_i32_0 = arith.constant 0 : i32
    return %arg0, %c0_i32 : i32, i32
  }
  func.func @transform_2(%arg0: i32) -> (i32, i32) {
    %c0_i32 = arith.constant 0 : i32
    %c0_i32_0 = arith.constant 0 : i32
    return %arg0, %c0_i32 : i32, i32
  }
  func.func @transform_3(%arg0: i32) -> (i32, i32) {
    %c0_i32 = arith.constant 0 : i32
    %c0_i32_0 = arith.constant 0 : i32
    %c0_i32_1 = arith.constant 0 : i32
    return %c0_i32, %c0_i32_0 : i32, i32
  }
  func.func @transform_4(%arg0: i32) -> (i32, i32) {
    %c0_i32 = arith.constant 0 : i32
    %c0_i32_0 = arith.constant 0 : i32
    %c0_i32_1 = arith.constant 0 : i32
    return %c0_i32, %c0_i32_0 : i32, i32
  }
  func.func @transform_5(%arg0: i32) -> (i32, i32) {
    %c0_i32 = arith.constant 0 : i32
    %c0_i32_0 = arith.constant 0 : i32
    %c0_i32_1 = arith.constant 0 : i32
    return %c0_i32, %c0_i32_0 : i32, i32
  }
  func.func @transform_6(%arg0: i32) -> (i32, i32) {
    %c0_i32 = arith.constant 0 : i32
    %c0_i32_0 = arith.constant 0 : i32
    return %arg0, %c0_i32 : i32, i32
  }
}

</mosaic_0001>

<llo_original>
// kernel: tpu_custom_call.1
$region0: #{tpu_custom_call.1}
  #allocation0 [shape = 'u32[]', space=smem, size = 0x4, offset = 0x4, fixed_abs, tag = 'smem constant byte address 0x4 - core index']
  #allocation1 [shape = 'u32[72,128]{1,0:T(1,128)}', space=vmem, size = 0x9000, scoped, tag = 'internal scratch']
  #allocation2 [shape = 'f32[128,4]{1,0:T(8,128)}', space=vmem, size = 0x10000, scoped, tag = 'scratch operand']
  #allocation3 [shape = 'f32[32,4]{1,0:T(8,128)}', space=vmem, size = 0x4000, scoped, tag = 'scratch operand']
  #allocation4 [shape = 'f32[32,16]{1,0:T(8,128)}', space=vmem, size = 0x4000, scoped, tag = 'scratch operand']
  #allocation5 [shape = 'f32[1,1]{1,0:T(1,128)S(6)}', space=smem, size = 0x200, scoped, tag = 'scoped memory for tpu_custom_call.1']
  %s0 = inlined_call_operand.vmem [shape: f32[128,32], index: 0, kind: input, shape index: {}]
  %s1 = inlined_call_operand.vmem [shape: f32[128,32], index: 1, kind: input, shape index: {}]
  %s2 = inlined_call_operand.vmem [shape: f32[32,128], index: 2, kind: input, shape index: {}]
  %s3 = inlined_call_operand.vmem [shape: f32[56,32], index: 3, kind: input, shape index: {}]
  %s4 = inlined_call_operand.vmem [shape: f32[1,128], index: 4, kind: input, shape index: {}]
  %s5 = inlined_call_operand.<no memory space> [shape: f32[1,1], index: 5, kind: input, shape index: {}]
  %s6 = inlined_call_operand.hbm [shape: f32[32,128], index: 6, kind: output, shape index: {}]
  %s7 = sld [smem:[#allocation0]]
  $region34: #{tpu_custom_call.1} parent=0
    _
  %s9 = ssub.s32 1, %s7
  %s10 = scalar_select 0, %s9, %s7
  %11 = sst [smem:[#allocation5]] %s5
  $region1: #{tpu_custom_call.1} parent=0
    #allocation6 [shape = 'u8[16384]{0}', space=vmem, size = 0x4000, scoped, tag = 'output window, operand 0, single buffered']
    #allocation7 [shape = 's32[1]{0}', space=sflag, size = 0x4, scoped, tag = 'scoped memory for tpu_custom_call.1']
    %12 = vsyncpa [#allocation7], 0
    // Predicated region
    $region2: #{tpu_custom_call.1} parent=1 // pred_check
      _
    $region3: #{tpu_custom_call.1} parent=1 // pred_check_branch
      %14 = sbr.rel (0) target = $region5
    $region4: #{tpu_custom_call.1} parent=1 // pred_region
      _
    $region5: #{tpu_custom_call.1} parent=1 // pred_fallthru
      _
    // Predicated region
    $region6: #{tpu_custom_call.1} parent=1 // pred_check
      _
    $region7: #{tpu_custom_call.1} parent=1 // pred_check_branch
      %16 = sbr.rel (0) target = $region9
    $region8: #{tpu_custom_call.1} parent=1 // pred_region
      _
    $region9: #{tpu_custom_call.1} parent=1 // pred_fallthru
      _
    // Predicated region
    $region10: #{tpu_custom_call.1} parent=1 // pred_check
      _
    $region11: #{tpu_custom_call.1} parent=1 // pred_check_branch
      %18 = sbr.rel (0) target = $region13
    $region12: #{tpu_custom_call.1} parent=1 // pred_region
      _
    $region13: #{tpu_custom_call.1} parent=1 // pred_fallthru
      _
    // Predicated region
    $region14: #{tpu_custom_call.1} parent=1 // pred_check
      _
    $region15: #{tpu_custom_call.1} parent=1 // pred_check_branch
      %20 = sbr.rel (0) target = $region17
    $region16: #{tpu_custom_call.1} parent=1 // pred_region
      _
    $region17: #{tpu_custom_call.1} parent=1 // pred_fallthru
      _
    // Predicated region
    $region18: #{tpu_custom_call.1} parent=1 // pred_check
      _
    $region19: #{tpu_custom_call.1} parent=1 // pred_check_branch
      %22 = sbr.rel (0) target = $region21
    $region20: #{tpu_custom_call.1} parent=1 // pred_region
      _
    $region21: #{tpu_custom_call.1} parent=1 // pred_fallthru
      _
    // Predicated region
    $region22: #{tpu_custom_call.1} parent=1 // pred_check
      _
    $region23: #{tpu_custom_call.1} parent=1 // pred_check_branch
      %24 = sbr.rel (0) target = $region25
    $region24: #{tpu_custom_call.1} parent=1 // pred_region
      _
    $region25: #{tpu_custom_call.1} parent=1 // pred_fallthru
      _
    %s25 = sld [smem:[#allocation5]]
    %v26 = vld [vmem:[%s3] sm:$0xff]
    %v27 = vld [vmem:[%s3 + $0x8] sm:$0xff]
    %v28 = vld [vmem:[%s3 + $0x10] sm:$0xff]
    %v29 = vld [vmem:[%s3 + $0x18] sm:$0xff]
    %v30 = vld [vmem:[%s3 + $0x20] sm:$0x1]
    %v31 = vld [vmem:[%s3 + $0x28] sm:$0xff]
    %v32 = vld [vmem:[%s3 + $0x30] sm:$0xff]
    %v33 = vld [vmem:[%s0] sm:$0xff]
    %v34 = vld [vmem:[%s0 + $0x8] sm:$0xff]
    %v35 = vld [vmem:[%s0 + $0x10] sm:$0xff]
    %v36 = vld [vmem:[%s0 + $0x18] sm:$0xff]
    %v37 = vld [vmem:[%s0 + $0x20] sm:$0xff]
    %v38 = vld [vmem:[%s0 + $0x28] sm:$0xff]
    %v39 = vld [vmem:[%s0 + $0x30] sm:$0xff]
    %v40 = vld [vmem:[%s0 + $0x38] sm:$0xff]
    %v41 = vld [vmem:[%s0 + $0x40] sm:$0xff]
    %v42 = vld [vmem:[%s0 + $0x48] sm:$0xff]
    %v43 = vld [vmem:[%s0 + $0x50] sm:$0xff]
    %v44 = vld [vmem:[%s0 + $0x58] sm:$0xff]
    %v45 = vld [vmem:[%s0 + $0x60] sm:$0xff]
    %v46 = vld [vmem:[%s0 + $0x68] sm:$0xff]
    %v47 = vld [vmem:[%s0 + $0x70] sm:$0xff]
    %v48 = vld [vmem:[%s0 + $0x78] sm:$0xff]
    %v49 = vperm.slane %v30, 0
    %vm50 = vcmask 261120
    %v52 = vsel %vm50, %v33, 0
    %v55 = vsel %vm50, %v34, 0
    %v58 = vsel %vm50, %v35, 0
    %v61 = vsel %vm50, %v36, 0
    %v64 = vsel %vm50, %v37, 0
    %v67 = vsel %vm50, %v38, 0
    %v70 = vsel %vm50, %v39, 0
    %v73 = vsel %vm50, %v40, 0
    %v76 = vsel %vm50, %v41, 0
    %v79 = vsel %vm50, %v42, 0
    %v82 = vsel %vm50, %v43, 0
    %v85 = vsel %vm50, %v44, 0
    %v88 = vsel %vm50, %v45, 0
    %v91 = vsel %vm50, %v46, 0
    %v94 = vsel %vm50, %v47, 0
    %v97 = vsel %vm50, %v48, 0
    %99 = vmatpush.msra.mxu0 0.0
    %100 = vmatpush.msra.mxu0 0.0
    %101 = vmatpush.msra.mxu0 0.0
    %102 = vmatpush.msra.mxu0 0.0
    %103 = vmatpush.msra.mxu0 0.0
    %104 = vmatpush.msra.mxu0 0.0
    %105 = vmatpush.msra.mxu0 0.0
    %106 = vmatpush.msra.mxu0 0.0
    %107 = vmatpush.msra.mxu0 0.0
    %108 = vmatpush.msra.mxu0 0.0
    %109 = vmatpush.msra.mxu0 0.0
    %110 = vmatpush.msra.mxu0 0.0
    %111 = vmatpush.msra.mxu0 %v29
    %112 = vmatpush.msra.mxu0 %v28
    %113 = vmatpush.msra.mxu0 %v27
    %114 = vmatpush.msra.mxu0 %v26
    %115 = vmatmul.f32.gmra.mxu0 %v52
    %v116 = vpop.f32.mrf.mxu0
    %v117 = vadd.f32 %v49, %v116
    %118 = vmatmul.f32.gmra.mxu0 %v55
    %v119 = vpop.f32.mrf.mxu0
    %v120 = vadd.f32 %v49, %v119
    %121 = vmatmul.f32.gmra.mxu0 %v58
    %v122 = vpop.f32.mrf.mxu0
    %v123 = vadd.f32 %v49, %v122
    %124 = vmatmul.f32.gmra.mxu0 %v61
    %v125 = vpop.f32.mrf.mxu0
    %v126 = vadd.f32 %v49, %v125
    %127 = vmatmul.f32.gmra.mxu0 %v64
    %v128 = vpop.f32.mrf.mxu0
    %v129 = vadd.f32 %v49, %v128
    %130 = vmatmul.f32.gmra.mxu0 %v67
    %v131 = vpop.f32.mrf.mxu0
    %v132 = vadd.f32 %v49, %v131
    %133 = vmatmul.f32.gmra.mxu0 %v70
    %v134 = vpop.f32.mrf.mxu0
    %v135 = vadd.f32 %v49, %v134
    %136 = vmatmul.f32.gmra.mxu0 %v73
    %v137 = vpop.f32.mrf.mxu0
    %v138 = vadd.f32 %v49, %v137
    %139 = vmatmul.f32.gmra.mxu0 %v76
    %v140 = vpop.f32.mrf.mxu0
    %v141 = vadd.f32 %v49, %v140
    %142 = vmatmul.f32.gmra.mxu0 %v79
    %v143 = vpop.f32.mrf.mxu0
    %v144 = vadd.f32 %v49, %v143
    %145 = vmatmul.f32.gmra.mxu0 %v82
    %v146 = vpop.f32.mrf.mxu0
    %v147 = vadd.f32 %v49, %v146
    %148 = vmatmul.f32.gmra.mxu0 %v85
    %v149 = vpop.f32.mrf.mxu0
    %v150 = vadd.f32 %v49, %v149
    %151 = vmatmul.f32.gmra.mxu0 %v88
    %v152 = vpop.f32.mrf.mxu0
    %v153 = vadd.f32 %v49, %v152
    %154 = vmatmul.f32.gmra.mxu0 %v91
    %v155 = vpop.f32.mrf.mxu0
    %v156 = vadd.f32 %v49, %v155
    %157 = vmatmul.f32.gmra.mxu0 %v94
    %v158 = vpop.f32.mrf.mxu0
    %v159 = vadd.f32 %v49, %v158
    %160 = vmatmul.f32.gmra.mxu0 %v97
    %v161 = vpop.f32.mrf.mxu0
    %v162 = vadd.f32 %v49, %v161
    %163 = vdwg.mxu0
    %vm164 = vcmask 31744
    %165 = vst.msk [vmem:[#allocation2] sm:$0xff] %vm164, %v117
    %166 = vst.msk [vmem:[#allocation2 + $0x8] sm:$0xff] %vm164, %v120
    %167 = vst.msk [vmem:[#allocation2 + $0x10] sm:$0xff] %vm164, %v123
    %168 = vst.msk [vmem:[#allocation2 + $0x18] sm:$0xff] %vm164, %v126
    %169 = vst.msk [vmem:[#allocation2 + $0x20] sm:$0xff] %vm164, %v129
    %170 = vst.msk [vmem:[#allocation2 + $0x28] sm:$0xff] %vm164, %v132
    %171 = vst.msk [vmem:[#allocation2 + $0x30] sm:$0xff] %vm164, %v135
    %172 = vst.msk [vmem:[#allocation2 + $0x38] sm:$0xff] %vm164, %v138
    %173 = vst.msk [vmem:[#allocation2 + $0x40] sm:$0xff] %vm164, %v141
    %174 = vst.msk [vmem:[#allocation2 + $0x48] sm:$0xff] %vm164, %v144
    %175 = vst.msk [vmem:[#allocation2 + $0x50] sm:$0xff] %vm164, %v147
    %176 = vst.msk [vmem:[#allocation2 + $0x58] sm:$0xff] %vm164, %v150
    %177 = vst.msk [vmem:[#allocation2 + $0x60] sm:$0xff] %vm164, %v153
    %178 = vst.msk [vmem:[#allocation2 + $0x68] sm:$0xff] %vm164, %v156
    %179 = vst.msk [vmem:[#allocation2 + $0x70] sm:$0xff] %vm164, %v159
    %180 = vst.msk [vmem:[#allocation2 + $0x78] sm:$0xff] %vm164, %v162
    %v181 = vld [vmem:[%s1] sm:$0xff]
    %v182 = vld [vmem:[%s1 + $0x8] sm:$0xff]
    %v183 = vld [vmem:[%s1 + $0x10] sm:$0xff]
    %v184 = vld [vmem:[%s1 + $0x18] sm:$0xff]
    %v185 = vld [vmem:[%s1 + $0x20] sm:$0xff]
    %v186 = vld [vmem:[%s1 + $0x28] sm:$0xff]
    %v187 = vld [vmem:[%s1 + $0x30] sm:$0xff]
    %v188 = vld [vmem:[%s1 + $0x38] sm:$0xff]
    %v189 = vld [vmem:[%s1 + $0x40] sm:$0xff]
    %v190 = vld [vmem:[%s1 + $0x48] sm:$0xff]
    %v191 = vld [vmem:[%s1 + $0x50] sm:$0xff]
    %v192 = vld [vmem:[%s1 + $0x58] sm:$0xff]
    %v193 = vld [vmem:[%s1 + $0x60] sm:$0xff]
    %v194 = vld [vmem:[%s1 + $0x68] sm:$0xff]
    %v195 = vld [vmem:[%s1 + $0x70] sm:$0xff]
    %v196 = vld [vmem:[%s1 + $0x78] sm:$0xff]
    %201 = vrot.lane.b32.xlu0 %v26, 124
    %v202 = vpop.permute.xlu0 %201
    %203 = vrot.lane.b32.xlu0 %v27, 124
    %v204 = vpop.permute.xlu0 %203
    %205 = vrot.lane.b32.xlu0 %v28, 124
    %v206 = vpop.permute.xlu0 %205
    %207 = vrot.lane.b32.xlu0 %v29, 124
    %v208 = vpop.permute.xlu0 %207
    %v214 = vsel %vm50, %v181, 0
    %v217 = vsel %vm50, %v182, 0
    %v220 = vsel %vm50, %v183, 0
    %v223 = vsel %vm50, %v184, 0
    %v226 = vsel %vm50, %v185, 0
    %v229 = vsel %vm50, %v186, 0
    %v232 = vsel %vm50, %v187, 0
    %v235 = vsel %vm50, %v188, 0
    %v238 = vsel %vm50, %v189, 0
    %v241 = vsel %vm50, %v190, 0
    %v244 = vsel %vm50, %v191, 0
    %v247 = vsel %vm50, %v192, 0
    %v250 = vsel %vm50, %v193, 0
    %v253 = vsel %vm50, %v194, 0
    %v256 = vsel %vm50, %v195, 0
    %v259 = vsel %vm50, %v196, 0
    %261 = vmatpush.msra.mxu0 0.0
    %262 = vmatpush.msra.mxu0 0.0
    %263 = vmatpush.msra.mxu0 0.0
    %264 = vmatpush.msra.mxu0 0.0
    %265 = vmatpush.msra.mxu0 0.0
    %266 = vmatpush.msra.mxu0 0.0
    %267 = vmatpush.msra.mxu0 0.0
    %268 = vmatpush.msra.mxu0 0.0
    %269 = vmatpush.msra.mxu0 0.0
    %270 = vmatpush.msra.mxu0 0.0
    %271 = vmatpush.msra.mxu0 0.0
    %272 = vmatpush.msra.mxu0 0.0
    %273 = vmatpush.msra.mxu0 %v208
    %274 = vmatpush.msra.mxu0 %v206
    %275 = vmatpush.msra.mxu0 %v204
    %276 = vmatpush.msra.mxu0 %v202
    %277 = vmatmul.f32.gmra.mxu0 %v214
    %v278 = vpop.f32.mrf.mxu0
    %v279 = vadd.f32 0.0, %v278
    %280 = vmatmul.f32.gmra.mxu0 %v217
    %v281 = vpop.f32.mrf.mxu0
    %v282 = vadd.f32 0.0, %v281
    %283 = vmatmul.f32.gmra.mxu0 %v220
    %v284 = vpop.f32.mrf.mxu0
    %v285 = vadd.f32 0.0, %v284
    %286 = vmatmul.f32.gmra.mxu0 %v223
    %v287 = vpop.f32.mrf.mxu0
    %v288 = vadd.f32 0.0, %v287
    %289 = vmatmul.f32.gmra.mxu0 %v226
    %v290 = vpop.f32.mrf.mxu0
    %v291 = vadd.f32 0.0, %v290
    %292 = vmatmul.f32.gmra.mxu0 %v229
    %v293 = vpop.f32.mrf.mxu0
    %v294 = vadd.f32 0.0, %v293
    %295 = vmatmul.f32.gmra.mxu0 %v232
    %v296 = vpop.f32.mrf.mxu0
    %v297 = vadd.f32 0.0, %v296
    %298 = vmatmul.f32.gmra.mxu0 %v235
    %v299 = vpop.f32.mrf.mxu0
    %v300 = vadd.f32 0.0, %v299
    %301 = vmatmul.f32.gmra.mxu0 %v238
    %v302 = vpop.f32.mrf.mxu0
    %v303 = vadd.f32 0.0, %v302
    %304 = vmatmul.f32.gmra.mxu0 %v241
    %v305 = vpop.f32.mrf.mxu0
    %v306 = vadd.f32 0.0, %v305
    %307 = vmatmul.f32.gmra.mxu0 %v244
    %v308 = vpop.f32.mrf.mxu0
    %v309 = vadd.f32 0.0, %v308
    %310 = vmatmul.f32.gmra.mxu0 %v247
    %v311 = vpop.f32.mrf.mxu0
    %v312 = vadd.f32 0.0, %v311
    %313 = vmatmul.f32.gmra.mxu0 %v250
    %v314 = vpop.f32.mrf.mxu0
    %v315 = vadd.f32 0.0, %v314
    %316 = vmatmul.f32.gmra.mxu0 %v253
    %v317 = vpop.f32.mrf.mxu0
    %v318 = vadd.f32 0.0, %v317
    %319 = vmatmul.f32.gmra.mxu0 %v256
    %v320 = vpop.f32.mrf.mxu0
    %v321 = vadd.f32 0.0, %v320
    %322 = vmatmul.f32.gmra.mxu0 %v259
    %v323 = vpop.f32.mrf.mxu0
    %v324 = vadd.f32 0.0, %v323
    %325 = vdwg.mxu0
    %v326 = vmax.f32 %v279, %v291
    %v327 = vmax.f32 %v282, %v294
    %v328 = vmax.f32 %v285, %v297
    %v329 = vmax.f32 %v288, %v300
    %v330 = vmax.f32 %v303, %v315
    %v331 = vmax.f32 %v306, %v318
    %v332 = vmax.f32 %v309, %v321
    %v333 = vmax.f32 %v312, %v324
    %v334 = vmax.f32 %v326, %v330
    %v335 = vmax.f32 %v327, %v331
    %v336 = vmax.f32 %v328, %v332
    %v337 = vmax.f32 %v329, %v333
    %339 = vrot.lane.b32.xlu0 %v49, 124
    %v340 = vpop.permute.xlu0 %339
    %v342 = vadd.f32 %v334, %v340
    %v343 = vadd.f32 %v335, %v340
    %v344 = vadd.f32 %v336, %v340
    %v345 = vadd.f32 %v337, %v340
    %346 = vst.msk [vmem:[#allocation3] sm:$0xff] %vm164, %v342
    %347 = vst.msk [vmem:[#allocation3 + $0x8] sm:$0xff] %vm164, %v343
    %348 = vst.msk [vmem:[#allocation3 + $0x10] sm:$0xff] %vm164, %v344
    %349 = vst.msk [vmem:[#allocation3 + $0x18] sm:$0xff] %vm164, %v345
    %354 = vrot.lane.b32.xlu0 %v342, 124
    %v355 = vpop.permute.xlu0 %354
    %356 = vrot.lane.b32.xlu0 %v343, 124
    %v357 = vpop.permute.xlu0 %356
    %358 = vrot.lane.b32.xlu0 %v344, 124
    %v359 = vpop.permute.xlu0 %358
    %360 = vrot.lane.b32.xlu0 %v345, 124
    %v361 = vpop.permute.xlu0 %360
    %vm366 = vcmask 130048
    %367 = vst.msk [vmem:[#allocation4] sm:$0xff] %vm366, %v355
    %368 = vst.msk [vmem:[#allocation4 + $0x8] sm:$0xff] %vm366, %v357
    %369 = vst.msk [vmem:[#allocation4 + $0x10] sm:$0xff] %vm366, %v359
    %370 = vst.msk [vmem:[#allocation4 + $0x18] sm:$0xff] %vm366, %v361
    %v371 = vld [vmem:[%s4] sm:$0x1]
    %v372 = vstv %s25
    %v373 = vmul.f32 %v372, %v371
    %v375 = vperm.slane %v373, 0
    %v377 = vld [vmem:[#allocation2] sm:$0xff]
    %v378 = vld [vmem:[#allocation2 + $0x8] sm:$0xff]
    %v379 = vld [vmem:[#allocation2 + $0x10] sm:$0xff]
    %v380 = vld [vmem:[#allocation2 + $0x18] sm:$0xff]
    %v381 = vld [vmem:[#allocation2 + $0x20] sm:$0xff]
    %v382 = vld [vmem:[#allocation2 + $0x28] sm:$0xff]
    %v383 = vld [vmem:[#allocation2 + $0x30] sm:$0xff]
    %v384 = vld [vmem:[#allocation2 + $0x38] sm:$0xff]
    %v385 = vld [vmem:[#allocation3] sm:$0xff]
    %v386 = vld [vmem:[#allocation3 + $0x8] sm:$0xff]
    %v387 = vld [vmem:[#allocation4] sm:$0xff]
    %v388 = vld [vmem:[#allocation4 + $0x8] sm:$0xff]
    %v390 = vsel %vm164, %v377, 0
    %v393 = vsel %vm164, %v378, 0
    %v396 = vsel %vm164, %v379, 0
    %v399 = vsel %vm164, %v380, 0
    %v402 = vsel %vm164, %v381, 0
    %v405 = vsel %vm164, %v382, 0
    %v408 = vsel %vm164, %v383, 0
    %v411 = vsel %vm164, %v384, 0
    %v414 = vsel %vm164, %v385, 0
    %v417 = vsel %vm164, %v386, 0
    %419 = vmatpush.xpose.msra.mxu0 0.0
    %420 = vmatpush.xpose.msra.mxu0 0.0
    %421 = vmatpush.xpose.msra.mxu0 0.0
    %422 = vmatpush.xpose.msra.mxu0 0.0
    %423 = vmatpush.xpose.msra.mxu0 0.0
    %424 = vmatpush.xpose.msra.mxu0 0.0
    %425 = vmatpush.xpose.msra.mxu0 0.0
    %426 = vmatpush.xpose.msra.mxu0 0.0
    %427 = vmatpush.xpose.msra.mxu0 0.0
    %428 = vmatpush.xpose.msra.mxu0 0.0
    %429 = vmatpush.xpose.msra.mxu0 0.0
    %430 = vmatpush.xpose.msra.mxu0 0.0
    %431 = vmatpush.xpose.msra.mxu0 0.0
    %432 = vmatpush.xpose.msra.mxu0 0.0
    %433 = vmatpush.xpose.msra.mxu0 %v417
    %434 = vmatpush.xpose.msra.mxu0 %v414
    %435 = vmatmul.f32.gmra.mxu0 %v390
    %v436 = vpop.f32.mrf.mxu0
    %v437 = vadd.f32 0.0, %v436
    %438 = vmatmul.f32.gmra.mxu0 %v393
    %v439 = vpop.f32.mrf.mxu0
    %v440 = vadd.f32 0.0, %v439
    %441 = vmatmul.f32.gmra.mxu0 %v396
    %v442 = vpop.f32.mrf.mxu0
    %v443 = vadd.f32 0.0, %v442
    %444 = vmatmul.f32.gmra.mxu0 %v399
    %v445 = vpop.f32.mrf.mxu0
    %v446 = vadd.f32 0.0, %v445
    %447 = vmatmul.f32.gmra.mxu0 %v402
    %v448 = vpop.f32.mrf.mxu0
    %v449 = vadd.f32 0.0, %v448
    %450 = vmatmul.f32.gmra.mxu0 %v405
    %v451 = vpop.f32.mrf.mxu0
    %v452 = vadd.f32 0.0, %v451
    %453 = vmatmul.f32.gmra.mxu0 %v408
    %v454 = vpop.f32.mrf.mxu0
    %v455 = vadd.f32 0.0, %v454
    %456 = vmatmul.f32.gmra.mxu0 %v411
    %v457 = vpop.f32.mrf.mxu0
    %v458 = vadd.f32 0.0, %v457
    %459 = vdwg.mxu0
    %v460 = vsel %vm366, %v437, -inf
    %461 = vmax.xlane.f32.xlu0 %v460
    %v462 = vpop.xlane.xlu0 %461
    %v463 = vsel %vm366, %v440, -inf
    %464 = vmax.xlane.f32.xlu0 %v463
    %v465 = vpop.xlane.xlu0 %464
    %v466 = vsel %vm366, %v443, -inf
    %467 = vmax.xlane.f32.xlu0 %v466
    %v468 = vpop.xlane.xlu0 %467
    %v469 = vsel %vm366, %v446, -inf
    %470 = vmax.xlane.f32.xlu0 %v469
    %v471 = vpop.xlane.xlu0 %470
    %v472 = vsel %vm366, %v449, -inf
    %473 = vmax.xlane.f32.xlu0 %v472
    %v474 = vpop.xlane.xlu0 %473
    %v475 = vsel %vm366, %v452, -inf
    %476 = vmax.xlane.f32.xlu0 %v475
    %v477 = vpop.xlane.xlu0 %476
    %v478 = vsel %vm366, %v455, -inf
    %479 = vmax.xlane.f32.xlu0 %v478
    %v480 = vpop.xlane.xlu0 %479
    %v481 = vsel %vm366, %v458, -inf
    %482 = vmax.xlane.f32.xlu0 %v481
    %v483 = vpop.xlane.xlu0 %482
    %v484 = vsub.f32 %v437, %v462
    %v485 = vsub.f32 %v440, %v465
    %v486 = vsub.f32 %v443, %v468
    %v487 = vsub.f32 %v446, %v471
    %v488 = vsub.f32 %v449, %v474
    %v489 = vsub.f32 %v452, %v477
    %v490 = vsub.f32 %v455, %v480
    %v491 = vsub.f32 %v458, %v483
    %v492 = vmul.f32 %v484, 1.442695
    %v493 = vpow.pop %v492
    %v494 = vmul.f32 %v485, 1.442695
    %v495 = vpow.pop %v494
    %v496 = vmul.f32 %v486, 1.442695
    %v497 = vpow.pop %v496
    %v498 = vmul.f32 %v487, 1.442695
    %v499 = vpow.pop %v498
    %v500 = vmul.f32 %v488, 1.442695
    %v501 = vpow.pop %v500
    %v502 = vmul.f32 %v489, 1.442695
    %v503 = vpow.pop %v502
    %v504 = vmul.f32 %v490, 1.442695
    %v505 = vpow.pop %v504
    %v506 = vmul.f32 %v491, 1.442695
    %v507 = vpow.pop %v506
    %v508 = vsel %vm366, %v493, 0.0
    %509 = vadd.xlane.f32.xlu0 %v508
    %v510 = vpop.xlane.xlu0 %509
    %v511 = vsel %vm366, %v495, 0.0
    %512 = vadd.xlane.f32.xlu0 %v511
    %v513 = vpop.xlane.xlu0 %512
    %v514 = vsel %vm366, %v497, 0.0
    %515 = vadd.xlane.f32.xlu0 %v514
    %v516 = vpop.xlane.xlu0 %515
    %v517 = vsel %vm366, %v499, 0.0
    %518 = vadd.xlane.f32.xlu0 %v517
    %v519 = vpop.xlane.xlu0 %518
    %v520 = vsel %vm366, %v501, 0.0
    %521 = vadd.xlane.f32.xlu0 %v520
    %v522 = vpop.xlane.xlu0 %521
    %v523 = vsel %vm366, %v503, 0.0
    %524 = vadd.xlane.f32.xlu0 %v523
    %v525 = vpop.xlane.xlu0 %524
    %v526 = vsel %vm366, %v505, 0.0
    %527 = vadd.xlane.f32.xlu0 %v526
    %v528 = vpop.xlane.xlu0 %527
    %v529 = vsel %vm366, %v507, 0.0
    %530 = vadd.xlane.f32.xlu0 %v529
    %v531 = vpop.xlane.xlu0 %530
    %v533 = vsel %vm366, %v493, 0
    %v536 = vsel %vm366, %v495, 0
    %v539 = vsel %vm366, %v497, 0
    %v542 = vsel %vm366, %v499, 0
    %v545 = vsel %vm366, %v501, 0
    %v548 = vsel %vm366, %v503, 0
    %v551 = vsel %vm366, %v505, 0
    %v554 = vsel %vm366, %v507, 0
    %556 = vmatpush.msra.mxu0 0.0
    %557 = vmatpush.msra.mxu0 0.0
    %558 = vmatpush.msra.mxu0 0.0
    %559 = vmatpush.msra.mxu0 0.0
    %560 = vmatpush.msra.mxu0 0.0
    %561 = vmatpush.msra.mxu0 0.0
    %562 = vmatpush.msra.mxu0 0.0
    %563 = vmatpush.msra.mxu0 0.0
    %564 = vmatpush.msra.mxu0 0.0
    %565 = vmatpush.msra.mxu0 0.0
    %566 = vmatpush.msra.mxu0 0.0
    %567 = vmatpush.msra.mxu0 0.0
    %568 = vmatpush.msra.mxu0 0.0
    %569 = vmatpush.msra.mxu0 0.0
    %570 = vmatpush.msra.mxu0 %v388
    %571 = vmatpush.msra.mxu0 %v387
    %572 = vmatmul.f32.gmra.mxu0 %v533
    %v573 = vpop.f32.mrf.mxu0
    %v574 = vadd.f32 0.0, %v573
    %575 = vmatmul.f32.gmra.mxu0 %v536
    %v576 = vpop.f32.mrf.mxu0
    %v577 = vadd.f32 0.0, %v576
    %578 = vmatmul.f32.gmra.mxu0 %v539
    %v579 = vpop.f32.mrf.mxu0
    %v580 = vadd.f32 0.0, %v579
    %581 = vmatmul.f32.gmra.mxu0 %v542
    %v582 = vpop.f32.mrf.mxu0
    %v583 = vadd.f32 0.0, %v582
    %584 = vmatmul.f32.gmra.mxu0 %v545
    %v585 = vpop.f32.mrf.mxu0
    %v586 = vadd.f32 0.0, %v585
    %587 = vmatmul.f32.gmra.mxu0 %v548
    %v588 = vpop.f32.mrf.mxu0
    %v589 = vadd.f32 0.0, %v588
    %590 = vmatmul.f32.gmra.mxu0 %v551
    %v591 = vpop.f32.mrf.mxu0
    %v592 = vadd.f32 0.0, %v591
    %593 = vmatmul.f32.gmra.mxu0 %v554
    %v594 = vpop.f32.mrf.mxu0
    %v595 = vadd.f32 0.0, %v594
    %596 = vdwg.mxu0
    %v597 = vrcp.pop %v510
    %v598 = vrcp.pop %v513
    %v599 = vrcp.pop %v516
    %v600 = vrcp.pop %v519
    %v601 = vrcp.pop %v522
    %v602 = vrcp.pop %v525
    %v603 = vrcp.pop %v528
    %v604 = vrcp.pop %v531
    %v605 = vmul.f32 %v574, %v597
    %v606 = vmul.f32 %v577, %v598
    %v607 = vmul.f32 %v580, %v599
    %v608 = vmul.f32 %v583, %v600
    %v609 = vmul.f32 %v586, %v601
    %v610 = vmul.f32 %v589, %v602
    %v611 = vmul.f32 %v592, %v603
    %v612 = vmul.f32 %v595, %v604
    %v614 = vsel %vm366, %v605, 0
    %v617 = vsel %vm366, %v606, 0
    %v620 = vsel %vm366, %v607, 0
    %v623 = vsel %vm366, %v608, 0
    %v626 = vsel %vm366, %v609, 0
    %v629 = vsel %vm366, %v610, 0
    %v632 = vsel %vm366, %v611, 0
    %v635 = vsel %vm366, %v612, 0
    %637 = vmatpush.msra.mxu0 0.0
    %638 = vmatpush.msra.mxu0 0.0
    %639 = vmatpush.msra.mxu0 0.0
    %640 = vmatpush.msra.mxu0 0.0
    %641 = vmatpush.msra.mxu0 0.0
    %642 = vmatpush.msra.mxu0 0.0
    %643 = vmatpush.msra.mxu0 0.0
    %644 = vmatpush.msra.mxu0 0.0
    %645 = vmatpush.msra.mxu0 0.0
    %646 = vmatpush.msra.mxu0 0.0
    %647 = vmatpush.msra.mxu0 0.0
    %648 = vmatpush.msra.mxu0 0.0
    %649 = vmatpush.msra.mxu0 0.0
    %650 = vmatpush.msra.mxu0 0.0
    %651 = vmatpush.msra.mxu0 %v32
    %652 = vmatpush.msra.mxu0 %v31
    %653 = vmatmul.f32.gmra.mxu0 %v614
    %v654 = vpop.f32.mrf.mxu0
    %v655 = vadd.f32 0.0, %v654
    %656 = vmatmul.f32.gmra.mxu0 %v617
    %v657 = vpop.f32.mrf.mxu0
    %v658 = vadd.f32 0.0, %v657
    %659 = vmatmul.f32.gmra.mxu0 %v620
    %v660 = vpop.f32.mrf.mxu0
    %v661 = vadd.f32 0.0, %v660
    %662 = vmatmul.f32.gmra.mxu0 %v623
    %v663 = vpop.f32.mrf.mxu0
    %v664 = vadd.f32 0.0, %v663
    %665 = vmatmul.f32.gmra.mxu0 %v626
    %v666 = vpop.f32.mrf.mxu0
    %v667 = vadd.f32 0.0, %v666
    %668 = vmatmul.f32.gmra.mxu0 %v629
    %v669 = vpop.f32.mrf.mxu0
    %v670 = vadd.f32 0.0, %v669
    %671 = vmatmul.f32.gmra.mxu0 %v632
    %v672 = vpop.f32.mrf.mxu0
    %v673 = vadd.f32 0.0, %v672
    %674 = vmatmul.f32.gmra.mxu0 %v635
    %v675 = vpop.f32.mrf.mxu0
    %v676 = vadd.f32 0.0, %v675
    %677 = vdwg.mxu0
    %680 = vrot.lane.b32.xlu0 %v661, 32
    %v681 = vpop.permute.xlu0 %680
    %682 = vrot.lane.b32.xlu0 %v664, 32
    %v683 = vpop.permute.xlu0 %682
    %688 = vrot.lane.b32.xlu0 %v667, 64
    %v689 = vpop.permute.xlu0 %688
    %690 = vrot.lane.b32.xlu0 %v670, 64
    %v691 = vpop.permute.xlu0 %690
    %696 = vrot.lane.b32.xlu0 %v673, 96
    %v697 = vpop.permute.xlu0 %696
    %698 = vrot.lane.b32.xlu0 %v676, 96
    %v699 = vpop.permute.xlu0 %698
    %v702 = vsel %vm50, %v655, %v681
    %v703 = vsel %vm50, %v658, %v683
    %vm704 = vcmask 523264
    %v705 = vsel %vm704, %v702, %v689
    %v706 = vsel %vm704, %v703, %v691
    %vm707 = vcmask 785408
    %v708 = vsel %vm707, %v705, %v697
    %v709 = vsel %vm707, %v706, %v699
    %v710 = vmul.f32 %v372, %v708
    %v711 = vmul.f32 %v372, %v709
    %v712 = vadd.f32 %v710, %v375
    %v713 = vadd.f32 %v711, %v375
    %v714 = vld [vmem:[%s2] sm:$0xff]
    %v715 = vld [vmem:[%s2 + $0x8] sm:$0xff]
    %v716 = vadd.f32 %v712, %v714
    %v717 = vadd.f32 %v713, %v715
    %718 = vst [vmem:[#allocation6] sm:$0xff] %v716
    %719 = vst [vmem:[#allocation6 + $0x8] sm:$0xff] %v717
    %s720 = scalar_lea.vmem [#allocation2], 64
    %v721 = vld [vmem:[%s720] sm:$0xff]
    %v722 = vld [vmem:[%s720 + $0x8] sm:$0xff]
    %v723 = vld [vmem:[%s720 + $0x10] sm:$0xff]
    %v724 = vld [vmem:[%s720 + $0x18] sm:$0xff]
    %v725 = vld [vmem:[%s720 + $0x20] sm:$0xff]
    %v726 = vld [vmem:[%s720 + $0x28] sm:$0xff]
    %v727 = vld [vmem:[%s720 + $0x30] sm:$0xff]
    %v728 = vld [vmem:[%s720 + $0x38] sm:$0xff]
    %s729 = scalar_lea.vmem [#allocation3], 16
    %v730 = vld [vmem:[%s729] sm:$0xff]
    %v731 = vld [vmem:[%s729 + $0x8] sm:$0xff]
    %s732 = scalar_lea.vmem [#allocation4], 16
    %v733 = vld [vmem:[%s732] sm:$0xff]
    %v734 = vld [vmem:[%s732 + $0x8] sm:$0xff]
    %v736 = vsel %vm164, %v721, 0
    %v739 = vsel %vm164, %v722, 0
    %v742 = vsel %vm164, %v723, 0
    %v745 = vsel %vm164, %v724, 0
    %v748 = vsel %vm164, %v725, 0
    %v751 = vsel %vm164, %v726, 0
    %v754 = vsel %vm164, %v727, 0
    %v757 = vsel %vm164, %v728, 0
    %v760 = vsel %vm164, %v730, 0
    %v763 = vsel %vm164, %v731, 0
    %765 = vmatpush.xpose.msra.mxu0 0.0
    %766 = vmatpush.xpose.msra.mxu0 0.0
    %767 = vmatpush.xpose.msra.mxu0 0.0
    %768 = vmatpush.xpose.msra.mxu0 0.0
    %769 = vmatpush.xpose.msra.mxu0 0.0
    %770 = vmatpush.xpose.msra.mxu0 0.0
    %771 = vmatpush.xpose.msra.mxu0 0.0
    %772 = vmatpush.xpose.msra.mxu0 0.0
    %773 = vmatpush.xpose.msra.mxu0 0.0
    %774 = vmatpush.xpose.msra.mxu0 0.0
    %775 = vmatpush.xpose.msra.mxu0 0.0
    %776 = vmatpush.xpose.msra.mxu0 0.0
    %777 = vmatpush.xpose.msra.mxu0 0.0
    %778 = vmatpush.xpose.msra.mxu0 0.0
    %779 = vmatpush.xpose.msra.mxu0 %v763
    %780 = vmatpush.xpose.msra.mxu0 %v760
    %781 = vmatmul.f32.gmra.mxu0 %v736
    %v782 = vpop.f32.mrf.mxu0
    %v783 = vadd.f32 0.0, %v782
    %784 = vmatmul.f32.gmra.mxu0 %v739
    %v785 = vpop.f32.mrf.mxu0
    %v786 = vadd.f32 0.0, %v785
    %787 = vmatmul.f32.gmra.mxu0 %v742
    %v788 = vpop.f32.mrf.mxu0
    %v789 = vadd.f32 0.0, %v788
    %790 = vmatmul.f32.gmra.mxu0 %v745
    %v791 = vpop.f32.mrf.mxu0
    %v792 = vadd.f32 0.0, %v791
    %793 = vmatmul.f32.gmra.mxu0 %v748
    %v794 = vpop.f32.mrf.mxu0
    %v795 = vadd.f32 0.0, %v794
    %796 = vmatmul.f32.gmra.mxu0 %v751
    %v797 = vpop.f32.mrf.mxu0
    %v798 = vadd.f32 0.0, %v797
    %799 = vmatmul.f32.gmra.mxu0 %v754
    %v800 = vpop.f32.mrf.mxu0
    %v801 = vadd.f32 0.0, %v800
    %802 = vmatmul.f32.gmra.mxu0 %v757
    %v803 = vpop.f32.mrf.mxu0
    %v804 = vadd.f32 0.0, %v803
    %805 = vdwg.mxu0
    %v806 = vsel %vm366, %v783, -inf
    %807 = vmax.xlane.f32.xlu0 %v806
    %v808 = vpop.xlane.xlu0 %807
    %v809 = vsel %vm366, %v786, -inf
    %810 = vmax.xlane.f32.xlu0 %v809
    %v811 = vpop.xlane.xlu0 %810
    %v812 = vsel %vm366, %v789, -inf
    %813 = vmax.xlane.f32.xlu0 %v812
    %v814 = vpop.xlane.xlu0 %813
    %v815 = vsel %vm366, %v792, -inf
    %816 = vmax.xlane.f32.xlu0 %v815
    %v817 = vpop.xlane.xlu0 %816
    %v818 = vsel %vm366, %v795, -inf
    %819 = vmax.xlane.f32.xlu0 %v818
    %v820 = vpop.xlane.xlu0 %819
    %v821 = vsel %vm366, %v798, -inf
    %822 = vmax.xlane.f32.xlu0 %v821
    %v823 = vpop.xlane.xlu0 %822
    %v824 = vsel %vm366, %v801, -inf
    %825 = vmax.xlane.f32.xlu0 %v824
    %v826 = vpop.xlane.xlu0 %825
    %v827 = vsel %vm366, %v804, -inf
    %828 = vmax.xlane.f32.xlu0 %v827
    %v829 = vpop.xlane.xlu0 %828
    %v830 = vsub.f32 %v783, %v808
    %v831 = vsub.f32 %v786, %v811
    %v832 = vsub.f32 %v789, %v814
    %v833 = vsub.f32 %v792, %v817
    %v834 = vsub.f32 %v795, %v820
    %v835 = vsub.f32 %v798, %v823
    %v836 = vsub.f32 %v801, %v826
    %v837 = vsub.f32 %v804, %v829
    %v838 = vmul.f32 %v830, 1.442695
    %v839 = vpow.pop %v838
    %v840 = vmul.f32 %v831, 1.442695
    %v841 = vpow.pop %v840
    %v842 = vmul.f32 %v832, 1.442695
    %v843 = vpow.pop %v842
    %v844 = vmul.f32 %v833, 1.442695
    %v845 = vpow.pop %v844
    %v846 = vmul.f32 %v834, 1.442695
    %v847 = vpow.pop %v846
    %v848 = vmul.f32 %v835, 1.442695
    %v849 = vpow.pop %v848
    %v850 = vmul.f32 %v836, 1.442695
    %v851 = vpow.pop %v850
    %v852 = vmul.f32 %v837, 1.442695
    %v853 = vpow.pop %v852
    %v854 = vsel %vm366, %v839, 0.0
    %855 = vadd.xlane.f32.xlu0 %v854
    %v856 = vpop.xlane.xlu0 %855
    %v857 = vsel %vm366, %v841, 0.0
    %858 = vadd.xlane.f32.xlu0 %v857
    %v859 = vpop.xlane.xlu0 %858
    %v860 = vsel %vm366, %v843, 0.0
    %861 = vadd.xlane.f32.xlu0 %v860
    %v862 = vpop.xlane.xlu0 %861
    %v863 = vsel %vm366, %v845, 0.0
    %864 = vadd.xlane.f32.xlu0 %v863
    %v865 = vpop.xlane.xlu0 %864
    %v866 = vsel %vm366, %v847, 0.0
    %867 = vadd.xlane.f32.xlu0 %v866
    %v868 = vpop.xlane.xlu0 %867
    %v869 = vsel %vm366, %v849, 0.0
    %870 = vadd.xlane.f32.xlu0 %v869
    %v871 = vpop.xlane.xlu0 %870
    %v872 = vsel %vm366, %v851, 0.0
    %873 = vadd.xlane.f32.xlu0 %v872
    %v874 = vpop.xlane.xlu0 %873
    %v875 = vsel %vm366, %v853, 0.0
    %876 = vadd.xlane.f32.xlu0 %v875
    %v877 = vpop.xlane.xlu0 %876
    %v879 = vsel %vm366, %v839, 0
    %v882 = vsel %vm366, %v841, 0
    %v885 = vsel %vm366, %v843, 0
    %v888 = vsel %vm366, %v845, 0
    %v891 = vsel %vm366, %v847, 0
    %v894 = vsel %vm366, %v849, 0
    %v897 = vsel %vm366, %v851, 0
    %v900 = vsel %vm366, %v853, 0
    %902 = vmatpush.msra.mxu0 0.0
    %903 = vmatpush.msra.mxu0 0.0
    %904 = vmatpush.msra.mxu0 0.0
    %905 = vmatpush.msra.mxu0 0.0
    %906 = vmatpush.msra.mxu0 0.0
    %907 = vmatpush.msra.mxu0 0.0
    %908 = vmatpush.msra.mxu0 0.0
    %909 = vmatpush.msra.mxu0 0.0
    %910 = vmatpush.msra.mxu0 0.0
    %911 = vmatpush.msra.mxu0 0.0
    %912 = vmatpush.msra.mxu0 0.0
    %913 = vmatpush.msra.mxu0 0.0
    %914 = vmatpush.msra.mxu0 0.0
    %915 = vmatpush.msra.mxu0 0.0
    %916 = vmatpush.msra.mxu0 %v734
    %917 = vmatpush.msra.mxu0 %v733
    %918 = vmatmul.f32.gmra.mxu0 %v879
    %v919 = vpop.f32.mrf.mxu0
    %v920 = vadd.f32 0.0, %v919
    %921 = vmatmul.f32.gmra.mxu0 %v882
    %v922 = vpop.f32.mrf.mxu0
    %v923 = vadd.f32 0.0, %v922
    %924 = vmatmul.f32.gmra.mxu0 %v885
    %v925 = vpop.f32.mrf.mxu0
    %v926 = vadd.f32 0.0, %v925
    %927 = vmatmul.f32.gmra.mxu0 %v888
    %v928 = vpop.f32.mrf.mxu0
    %v929 = vadd.f32 0.0, %v928
    %930 = vmatmul.f32.gmra.mxu0 %v891
    %v931 = vpop.f32.mrf.mxu0
    %v932 = vadd.f32 0.0, %v931
    %933 = vmatmul.f32.gmra.mxu0 %v894
    %v934 = vpop.f32.mrf.mxu0
    %v935 = vadd.f32 0.0, %v934
    %936 = vmatmul.f32.gmra.mxu0 %v897
    %v937 = vpop.f32.mrf.mxu0
    %v938 = vadd.f32 0.0, %v937
    %939 = vmatmul.f32.gmra.mxu0 %v900
    %v940 = vpop.f32.mrf.mxu0
    %v941 = vadd.f32 0.0, %v940
    %942 = vdwg.mxu0
    %v943 = vrcp.pop %v856
    %v944 = vrcp.pop %v859
    %v945 = vrcp.pop %v862
    %v946 = vrcp.pop %v865
    %v947 = vrcp.pop %v868
    %v948 = vrcp.pop %v871
    %v949 = vrcp.pop %v874
    %v950 = vrcp.pop %v877
    %v951 = vmul.f32 %v920, %v943
    %v952 = vmul.f32 %v923, %v944
    %v953 = vmul.f32 %v926, %v945
    %v954 = vmul.f32 %v929, %v946
    %v955 = vmul.f32 %v932, %v947
    %v956 = vmul.f32 %v935, %v948
    %v957 = vmul.f32 %v938, %v949
    %v958 = vmul.f32 %v941, %v950
    %v960 = vsel %vm366, %v951, 0
    %v963 = vsel %vm366, %v952, 0
    %v966 = vsel %vm366, %v953, 0
    %v969 = vsel %vm366, %v954, 0
    %v972 = vsel %vm366, %v955, 0
    %v975 = vsel %vm366, %v956, 0
    %v978 = vsel %vm366, %v957, 0
    %v981 = vsel %vm366, %v958, 0
    %983 = vmatpush.msra.mxu0 0.0
    %984 = vmatpush.msra.mxu0 0.0
    %985 = vmatpush.msra.mxu0 0.0
    %986 = vmatpush.msra.mxu0 0.0
    %987 = vmatpush.msra.mxu0 0.0
    %988 = vmatpush.msra.mxu0 0.0
    %989 = vmatpush.msra.mxu0 0.0
    %990 = vmatpush.msra.mxu0 0.0
    %991 = vmatpush.msra.mxu0 0.0
    %992 = vmatpush.msra.mxu0 0.0
    %993 = vmatpush.msra.mxu0 0.0
    %994 = vmatpush.msra.mxu0 0.0
    %995 = vmatpush.msra.mxu0 0.0
    %996 = vmatpush.msra.mxu0 0.0
    %997 = vmatpush.msra.mxu0 %v32
    %998 = vmatpush.msra.mxu0 %v31
    %999 = vmatmul.f32.gmra.mxu0 %v960
    %v1000 = vpop.f32.mrf.mxu0
    %v1001 = vadd.f32 0.0, %v1000
    %1002 = vmatmul.f32.gmra.mxu0 %v963
    %v1003 = vpop.f32.mrf.mxu0
    %v1004 = vadd.f32 0.0, %v1003
    %1005 = vmatmul.f32.gmra.mxu0 %v966
    %v1006 = vpop.f32.mrf.mxu0
    %v1007 = vadd.f32 0.0, %v1006
    %1008 = vmatmul.f32.gmra.mxu0 %v969
    %v1009 = vpop.f32.mrf.mxu0
    %v1010 = vadd.f32 0.0, %v1009
    %1011 = vmatmul.f32.gmra.mxu0 %v972
    %v1012 = vpop.f32.mrf.mxu0
    %v1013 = vadd.f32 0.0, %v1012
    %1014 = vmatmul.f32.gmra.mxu0 %v975
    %v1015 = vpop.f32.mrf.mxu0
    %v1016 = vadd.f32 0.0, %v1015
    %1017 = vmatmul.f32.gmra.mxu0 %v978
    %v1018 = vpop.f32.mrf.mxu0
    %v1019 = vadd.f32 0.0, %v1018
    %1020 = vmatmul.f32.gmra.mxu0 %v981
    %v1021 = vpop.f32.mrf.mxu0
    %v1022 = vadd.f32 0.0, %v1021
    %1023 = vdwg.mxu0
    %1026 = vrot.lane.b32.xlu0 %v1007, 32
    %v1027 = vpop.permute.xlu0 %1026
    %1028 = vrot.lane.b32.xlu0 %v1010, 32
    %v1029 = vpop.permute.xlu0 %1028
    %1034 = vrot.lane.b32.xlu0 %v1013, 64
    %v1035 = vpop.permute.xlu0 %1034
    %1036 = vrot.lane.b32.xlu0 %v1016, 64
    %v1037 = vpop.permute.xlu0 %1036
    %1042 = vrot.lane.b32.xlu0 %v1019, 96
    %v1043 = vpop.permute.xlu0 %1042
    %1044 = vrot.lane.b32.xlu0 %v1022, 96
    %v1045 = vpop.permute.xlu0 %1044
    %v1048 = vsel %vm50, %v1001, %v1027
    %v1049 = vsel %vm50, %v1004, %v1029
    %v1050 = vsel %vm704, %v1048, %v1035
    %v1051 = vsel %vm704, %v1049, %v1037
    %v1052 = vsel %vm707, %v1050, %v1043
    %v1053 = vsel %vm707, %v1051, %v1045
    %v1054 = vmul.f32 %v372, %v1052
    %v1055 = vmul.f32 %v372, %v1053
    %v1056 = vadd.f32 %v1054, %v375
    %v1057 = vadd.f32 %v1055, %v375
    %s1058 = scalar_lea.vmem %s2, 16
    %v1059 = vld [vmem:[%s1058] sm:$0xff]
    %v1060 = vld [vmem:[%s1058 + $0x8] sm:$0xff]
    %v1061 = vadd.f32 %v1056, %v1059
    %v1062 = vadd.f32 %v1057, %v1060
    %s1063 = scalar_lea.vmem [#allocation6], 16
    %1064 = vst [vmem:[%s1063] sm:$0xff] %v1061
    %1065 = vst [vmem:[%s1063 + $0x8] sm:$0xff] %v1062
    // Predicated region
    $region26: #{tpu_custom_call.1} parent=1 // pred_check
      _
    $region27: #{tpu_custom_call.1} parent=1 // pred_check_branch
      %1067 = sbr.rel (0) target = $region29
    $region28: #{tpu_custom_call.1} parent=1 // pred_region
      %1069 = vsyncadd [#allocation7], 0
      %s1070 = sshll.u32 [#allocation6], 4
      %s1071 = int_to_ptr.vmem [resolvable:$true] %s1070
      %s1072 = sshll.u32 %s6, 4
      %s1073 = int_to_ptr.hbm [resolvable:$true] %s1072
      %1078 = dma.vmem_to_hbm [thread:$0]  %s1071, 512, %s1073, [#allocation7], 128, 128, 8
    $region29: #{tpu_custom_call.1} parent=1 // pred_fallthru
      _
    // Predicated region
    $region30: #{tpu_custom_call.1} parent=1 // pred_check
      _
    $region31: #{tpu_custom_call.1} parent=1 // pred_check_branch
      %1080 = sbr.rel (0) target = $region33
    $region32: #{tpu_custom_call.1} parent=1 // pred_region
      %1082 = dma.done [#allocation7], 512
    $region33: #{tpu_custom_call.1} parent=1 // pred_fallthru
      _
    %1083 = vsyncpa [#allocation7], 1

</llo_original>
